<compile_context>
chip_gen: v7x
topology: tpu7x:2x2x1
jax: 0.10.0
libtpu: 0.0.40
codegen_flags: <defaults>
</compile_context>

<pallas_src>
import jax
import jax.numpy as jnp
from jax.experimental import pallas as pl
from jax.experimental.pallas import tpu as pltpu


LANE = 128
SUBLANE = 8
TARGET_TILE_BYTES = 4 * 1024 * 1024    # ~4 MiB per tile (dtype-aware rows)
VMEM_LIMIT_BYTES = 48 * 1024 * 1024    # headroom for 2x in + 2x out buffers


def _swish_kernel(beta_ref, x_ref, o_ref):
    # beta_ref: (1, 1) scalar in SMEM; x_ref / o_ref: (block_rows, LANE) in VMEM
    beta = beta_ref[0, 0]
    x = x_ref[...].astype(jnp.float32)
    y = x * jax.nn.sigmoid(beta * x)
    o_ref[...] = y.astype(o_ref.dtype)


def _block_rows_for(dtype, rows):
    """Rows per grid step targeting ~TARGET_TILE_BYTES, multiple of 8."""
    itemsize = jnp.dtype(dtype).itemsize
    target = max(TARGET_TILE_BYTES // (LANE * itemsize), SUBLANE)
    target = (target // SUBLANE) * SUBLANE
    if rows <= target:
        # block == full array dim is always a legal block shape
        return rows
    return target


def swish(x, beta):
    """x: any-shape array (e.g. NCHW). beta: scalar (learnable parameter)."""
    orig_shape = x.shape
    orig_dtype = x.dtype

    flat = x.reshape(-1)
    n = flat.shape[0]
    beta_f32 = jnp.asarray(beta, jnp.float32).reshape(())

    # Main lane-aligned part goes through the Pallas kernel; any <128-element
    # tail is handled with plain jnp (no full-array pad + slice copies).
    n_main = (n // LANE) * LANE
    tail = n - n_main

    outputs = []

    if n_main > 0:
        main = flat if tail == 0 else flat[:n_main]
        x2d = main.reshape(-1, LANE)          # (rows, 128)
        rows = x2d.shape[0]

        block_rows = _block_rows_for(orig_dtype, rows)
        grid = (pl.cdiv(rows, block_rows),)   # ragged last block is masked
        beta_arr = beta_f32.reshape(1, 1)

        out2d = pl.pallas_call(
            _swish_kernel,
            out_shape=jax.ShapeDtypeStruct((rows, LANE), orig_dtype),
            grid_spec=pltpu.PrefetchScalarGridSpec(
                num_scalar_prefetch=0,
                grid=grid,
                in_specs=[
                    pl.BlockSpec(memory_space=pltpu.SMEM),               # beta
                    pl.BlockSpec((block_rows, LANE), lambda i: (i, 0)),  # x tile
                ],
                out_specs=pl.BlockSpec((block_rows, LANE), lambda i: (i, 0)),
            ),
            compiler_params=pltpu.CompilerParams(
                dimension_semantics=("parallel",),
                vmem_limit_bytes=VMEM_LIMIT_BYTES,
            ),
        )(beta_arr, x2d)
        outputs.append(out2d.reshape(-1))

    if tail > 0:
        tail_x = flat[n_main:].astype(jnp.float32)
        y_tail = (tail_x * jax.nn.sigmoid(beta_f32 * tail_x)).astype(orig_dtype)
        outputs.append(y_tail)

    out_flat = outputs[0] if len(outputs) == 1 else jnp.concatenate(outputs)
    return out_flat.reshape(orig_shape)


class SwishPallas:
    """Mirror of the PyTorch Swish module (forward only)."""

    def __init__(self, beta=1.0, learnable=True):
        if learnable:
            # learnable scalar parameter, deterministically initialized
            self.beta = jnp.ones((1,), jnp.float32) * beta
        else:
            self.beta = float(beta)

    def __call__(self, x):
        beta = self.beta[0] if isinstance(self.beta, jnp.ndarray) else self.beta
        return swish(x, beta)


if __name__ == "__main__":
    key = jax.random.PRNGKey(0)

    module = SwishPallas(beta=1.0, learnable=True)
    beta = module.beta[0]

    # Main case: NCHW input matching the PyTorch module usage.
    x = jax.random.normal(key, (2, 4, 16, 16), dtype=jnp.float32)
    y = jax.block_until_ready(module(x))
    y_ref = x * jax.nn.sigmoid(beta * x)
    assert y.shape == x.shape and y.dtype == x.dtype
    assert jnp.allclose(y, y_ref, atol=1e-6, rtol=1e-6)

    # Ragged case: exercises the kernel's partial last row block + jnp tail.
    k2 = jax.random.PRNGKey(0)
    x2 = jax.random.normal(k2, (7, 100), dtype=jnp.float32)   # 700 = 5*128 + 60
    y2 = jax.block_until_ready(module(x2))
    y2_ref = x2 * jax.nn.sigmoid(beta * x2)
    assert y2.shape == x2.shape and y2.dtype == x2.dtype
    assert jnp.allclose(y2, y2_ref, atol=1e-6, rtol=1e-6)

    # Tiny case smaller than one lane row: pure jnp tail path.
    x3 = jax.random.normal(k2, (3, 5, 7), dtype=jnp.float32)  # 105 elements
    y3 = jax.block_until_ready(module(x3))
    y3_ref = x3 * jax.nn.sigmoid(beta * x3)
    assert jnp.allclose(y3, y3_ref, atol=1e-6, rtol=1e-6)

    print("KERNEL_OK")
</pallas_src>

<mosaic_0001>
module attributes {stable_mosaic.version = 11 : i64} {
  func.func @_swish_kernel(%arg0: i32, %arg1: memref<1x1xf32, #tpu.memory_space<smem>>, %arg2: memref<16x128xf32, #tpu.memory_space<vmem>>, %arg3: memref<16x128xf32, #tpu.memory_space<vmem>>) attributes {dimension_semantics = [#tpu.dimension_semantics<parallel>], iteration_bounds = array<i64: 1>, scalar_prefetch = 0 : i64, scratch_operands = 0 : i64, tpu.core_type = #tpu.core_type<tc>, window_params = [{transform_indices = @transform_0, window_bounds = array<i64: 1, 1>}, {transform_indices = @transform_1, window_bounds = array<i64: 16, 128>}, {transform_indices = @transform_2, window_bounds = array<i64: 16, 128>}]} {
    %c0 = arith.constant 0 : index
    %c0_0 = arith.constant 0 : index
    %0 = memref.load %arg1[%c0, %c0_0] : memref<1x1xf32, #tpu.memory_space<smem>>
    %c0_1 = arith.constant 0 : index
    %c0_2 = arith.constant 0 : index
    %1 = vector.load %arg2[%c0_1, %c0_2] : memref<16x128xf32, #tpu.memory_space<vmem>>, vector<16x128xf32>
    %2 = vector.broadcast %0 : f32 to vector<16x128xf32>
    %3 = arith.mulf %2, %1 : vector<16x128xf32>
    %4 = arith.negf %3 : vector<16x128xf32>
    %5 = math.exp %4 : vector<16x128xf32>
    %cst = arith.constant 1.000000e+00 : f32
    %6 = vector.broadcast %cst : f32 to vector<16x128xf32>
    %7 = arith.addf %6, %5 : vector<16x128xf32>
    %8 = arith.divf %6, %7 : vector<16x128xf32>
    %9 = arith.mulf %1, %8 : vector<16x128xf32>
    %c0_3 = arith.constant 0 : index
    %c0_4 = arith.constant 0 : index
    %10 = vector.load %arg3[%c0_3, %c0_4] : memref<16x128xf32, #tpu.memory_space<vmem>>, vector<16x128xf32>
    tpu.vector_store %arg3[%c0_3, %c0_4], %9 {strides = array<i32>} : memref<16x128xf32, #tpu.memory_space<vmem>>, vector<16x128xf32>,
    return
  }
  func.func @transform_0(%arg0: i32) -> (i32, i32) {
    %c0_i32 = arith.constant 0 : i32
    %c0_i32_0 = arith.constant 0 : i32
    %c0_i32_1 = arith.constant 0 : i32
    return %c0_i32, %c0_i32_0 : i32, i32
  }
  func.func @transform_1(%arg0: i32) -> (i32, i32) {
    %c0_i32 = arith.constant 0 : i32
    %c0_i32_0 = arith.constant 0 : i32
    return %arg0, %c0_i32 : i32, i32
  }
  func.func @transform_2(%arg0: i32) -> (i32, i32) {
    %c0_i32 = arith.constant 0 : i32
    %c0_i32_0 = arith.constant 0 : i32
    return %arg0, %c0_i32 : i32, i32
  }
}

</mosaic_0001>

<llo_original>
// kernel: tpu_custom_call.1
$region0: #{tpu_custom_call.1}
  #allocation0 [shape = 'u32[]', space=smem, size = 0x4, offset = 0x4, fixed_abs, tag = 'smem constant byte address 0x4 - core index']
  #allocation1 [shape = 'u32[144,128]{1,0:T(1,128)}', space=vmem, size = 0x12000, scoped, tag = 'internal scratch']
  #allocation2 [shape = 'f32[1,1]{1,0:T(1,128)S(6)}', space=smem, size = 0x200, scoped, tag = 'scoped memory for tpu_custom_call.1']
  %s0 = inlined_call_operand.<no memory space> [shape: f32[1,1], index: 0, kind: input, shape index: {}]
  %s1 = inlined_call_operand.hbm [shape: f32[16,128], index: 1, kind: input, shape index: {}]
  %s2 = inlined_call_operand.hbm [shape: f32[16,128], index: 2, kind: output, shape index: {}]
  %s3 = sld [smem:[#allocation0]]
  $region22: #{tpu_custom_call.1} parent=0
    _
  %s5 = ssub.s32 1, %s3
  %s6 = scalar_select 0, %s5, %s3
  %7 = sst [smem:[#allocation2]] %s0
  $region1: #{tpu_custom_call.1} parent=0
    #allocation3 [shape = 'u8[8192]{0}', space=vmem, size = 0x2000, scoped, tag = 'input window, operand 1, single buffered']
    #allocation4 [shape = 's32[1]{0}', space=sflag, size = 0x4, scoped, tag = 'scoped memory for tpu_custom_call.1']
    #allocation5 [shape = 's32[1]{0}', space=sflag, size = 0x4, scoped, tag = 'scoped memory for tpu_custom_call.1']
    #allocation6 [shape = 'u8[8192]{0}', space=vmem, size = 0x2000, scoped, tag = 'output window, operand 0, single buffered']
    %8 = vsyncpa [#allocation4], 0
    %9 = vsyncpa [#allocation5], 0
    // Predicated region
    $region2: #{tpu_custom_call.1} parent=1 // pred_check
      _
    $region3: #{tpu_custom_call.1} parent=1 // pred_check_branch
      %11 = sbr.rel (0) target = $region5
    $region4: #{tpu_custom_call.1} parent=1 // pred_region
      _
    $region5: #{tpu_custom_call.1} parent=1 // pred_fallthru
      _
    // Predicated region
    $region6: #{tpu_custom_call.1} parent=1 // pred_check
      _
    $region7: #{tpu_custom_call.1} parent=1 // pred_check_branch
      %13 = sbr.rel (0) target = $region9
    $region8: #{tpu_custom_call.1} parent=1 // pred_region
      %s15 = ssub.s32 256, 256
      %16 = vsyncadd [#allocation4], %s15
      %s17 = sshll.u32 [#allocation3], 4
      %s18 = int_to_ptr.vmem [resolvable:$true] %s17
      %23 = dma.hbm_to_vmem [thread:$0]  %s1, 256, %s18, [#allocation4], 128, 128, 8
    $region9: #{tpu_custom_call.1} parent=1 // pred_fallthru
      _
    // Predicated region
    $region10: #{tpu_custom_call.1} parent=1 // pred_check
      _
    $region11: #{tpu_custom_call.1} parent=1 // pred_check_branch
      %25 = sbr.rel (0) target = $region13
    $region12: #{tpu_custom_call.1} parent=1 // pred_region
      %26 = dma.done [#allocation4], 256
    $region13: #{tpu_custom_call.1} parent=1 // pred_fallthru
      _
    %s27 = sld [smem:[#allocation2]]
    %v28 = vld [vmem:[#allocation3] sm:$0xff]
    %v29 = vld [vmem:[#allocation3 + $0x8] sm:$0xff]
    %v30 = vstv %s27
    %v31 = vmul.f32 %v30, %v28
    %v32 = vmul.f32 %v30, %v29
    %v33 = vxor.u32 %v31, 2147483648
    %v34 = vxor.u32 %v32, 2147483648
    %v35 = vmul.f32 %v33, 1.442695
    %v36 = vpow.pop %v35
    %v37 = vmul.f32 %v34, 1.442695
    %v38 = vpow.pop %v37
    %v39 = vadd.f32 %v36, 1.0
    %v40 = vadd.f32 %v38, 1.0
    %v41 = vrcp.pop %v39
    %v42 = vmul.f32 1.0, %v41
    %v43 = vrcp.pop %v40
    %v44 = vmul.f32 1.0, %v43
    %v45 = vmul.f32 %v28, %v42
    %v46 = vmul.f32 %v29, %v44
    %47 = vst [vmem:[#allocation6] sm:$0xff] %v45
    %48 = vst [vmem:[#allocation6 + $0x8] sm:$0xff] %v46
    // Predicated region
    $region14: #{tpu_custom_call.1} parent=1 // pred_check
      _
    $region15: #{tpu_custom_call.1} parent=1 // pred_check_branch
      %50 = sbr.rel (0) target = $region17
    $region16: #{tpu_custom_call.1} parent=1 // pred_region
      %s52 = ssub.s32 256, 256
      %53 = vsyncadd [#allocation5], %s52
      %s54 = sshll.u32 [#allocation6], 4
      %s55 = int_to_ptr.vmem [resolvable:$true] %s54
      %60 = dma.vmem_to_hbm [thread:$0]  %s55, 256, %s2, [#allocation5], 128, 128, 8
    $region17: #{tpu_custom_call.1} parent=1 // pred_fallthru
      _
    // Predicated region
    $region18: #{tpu_custom_call.1} parent=1 // pred_check
      _
    $region19: #{tpu_custom_call.1} parent=1 // pred_check_branch
      %62 = sbr.rel (0) target = $region21
    $region20: #{tpu_custom_call.1} parent=1 // pred_region
      %63 = dma.done [#allocation5], 256
    $region21: #{tpu_custom_call.1} parent=1 // pred_fallthru
      _
    %64 = vsyncpa [#allocation4], 1
    %65 = vsyncpa [#allocation5], 1

</llo_original>
